<compile_context>
chip_gen: v5e
topology: v5e:2x2
jax: 0.10.0
libtpu: 0.0.40
codegen_flags: <defaults>
</compile_context>

<pallas_src>
import jax
import jax.numpy as jnp
from jax.experimental import pallas as pl
from jax.experimental.pallas import tpu as pltpu


def _round_up(a, b):
    return ((a + b - 1) // b) * b


def _fused_kernel(c_ref, x_ref, z_ref, o_ref):
    # c_ref : VMEM (8, 128) per-lane-parity coefficient vectors:
    #   row0 -> * x            row3 -> * z
    #   row1 -> * roll(x,-1)   row4 -> * roll(z,-1)   (partner for even lanes)
    #   row2 -> * roll(x,+1)   row5 -> * roll(z,+1)   (partner for odd lanes)
    #   row6 -> bias, row7 unused (sublane pad)
    # x_ref / z_ref / o_ref : VMEM (R, 128), interleaved [f0, f1, f0, f1, ...]
    x = x_ref[...]
    z = z_ref[...]
    # roll(v, s)[i] = v[(i - s) % 128]; 127 == -1 (mod 128).
    x_nxt = pltpu.roll(x, 127, axis=1)   # v[i+1]: feature-1 partner at even lanes
    x_prv = pltpu.roll(x, 1, axis=1)     # v[i-1]: feature-0 partner at odd lanes
    z_nxt = pltpu.roll(z, 127, axis=1)
    z_prv = pltpu.roll(z, 1, axis=1)
    o_ref[...] = (c_ref[0:1, :] * x
                  + c_ref[1:2, :] * x_nxt
                  + c_ref[2:3, :] * x_prv
                  + c_ref[3:4, :] * z
                  + c_ref[4:5, :] * z_nxt
                  + c_ref[5:6, :] * z_prv
                  + c_ref[6:7, :])


def fused_forward(x, z, w1, b1, w2, b2, *, block_rows=2048):
    """x, z: (N, 2). w1, w2: (2, 2) PyTorch [out, in] layout. b1, b2: (2,)."""
    n = x.shape[0]

    # ---- free algebraic fold into a single affine map ----------------------
    wa = (2.0 * w1 + w2).astype(jnp.float32)    # (2, 2) [out, in]
    wb = (-w1).astype(jnp.float32)
    bc = (b1 + b2).astype(jnp.float32)

    # Per-lane-parity coefficient vectors (even lane = feature 0, odd = 1).
    lane = jnp.arange(128)
    even = (lane % 2) == 0
    coeffs = jnp.stack([
        jnp.where(even, wa[0, 0], wa[1, 1]),   # * x
        jnp.where(even, wa[0, 1], 0.0),        # * roll(x, -1)
        jnp.where(even, 0.0, wa[1, 0]),        # * roll(x, +1)
        jnp.where(even, wb[0, 0], wb[1, 1]),   # * z
        jnp.where(even, wb[0, 1], 0.0),        # * roll(z, -1)
        jnp.where(even, 0.0, wb[1, 0]),        # * roll(z, +1)
        jnp.where(even, bc[0], bc[1]),         # bias
        jnp.zeros((128,), jnp.float32),        # sublane pad to 8 rows
    ]).astype(jnp.float32)                     # (8, 128)

    # ---- copy-free interleaved view: (N, 2) -> (2N,) -> (rows, 128) --------
    total = 2 * n
    rows = pl.cdiv(total, 128)
    flat_len = rows * 128
    x_flat = x.reshape(-1).astype(jnp.float32)
    z_flat = z.reshape(-1).astype(jnp.float32)
    if flat_len != total:                      # lane-alignment pad only (<128 elems)
        x_flat = jnp.pad(x_flat, (0, flat_len - total))
        z_flat = jnp.pad(z_flat, (0, flat_len - total))
    x2d = x_flat.reshape(rows, 128)
    z2d = z_flat.reshape(rows, 128)

    # ---- block sizing: ~1 MiB/array/step, sublane-dense, >=2 grid steps ----
    if rows < 8:
        br = rows                              # full-array block (tiny inputs)
    else:
        br = min(block_rows, max(8, _round_up(pl.cdiv(rows, 2), 8)))
    grid = (pl.cdiv(rows, br),)

    out2d = pl.pallas_call(
        _fused_kernel,
        out_shape=jax.ShapeDtypeStruct((rows, 128), jnp.float32),
        grid_spec=pltpu.PrefetchScalarGridSpec(
            num_scalar_prefetch=0,
            grid=grid,
            in_specs=[
                pl.BlockSpec((8, 128), lambda i: (0, 0)),    # coeffs (resident)
                pl.BlockSpec((br, 128), lambda i: (i, 0)),   # x tile
                pl.BlockSpec((br, 128), lambda i: (i, 0)),   # z tile
            ],
            out_specs=pl.BlockSpec((br, 128), lambda i: (i, 0)),
        ),
        compiler_params=pltpu.CompilerParams(
            dimension_semantics=("parallel",),
            vmem_limit_bytes=32 * 1024 * 1024,
        ),
        cost_estimate=pl.CostEstimate(
            flops=13 * flat_len,
            transcendentals=0,
            bytes_accessed=(3 * flat_len + 8 * 128) * 4,
        ),
    )(coeffs, x2d, z2d)

    # Un-view (free reshape) and drop the alignment tail.
    return out2d.reshape(-1)[:total].reshape(n, 2)


def reference_forward(x, z, w1, b1, w2, b2):
    lin1 = lambda v: v @ w1.T + b1
    lin2 = lambda v: v @ w2.T + b2
    h = lin1(x)
    h = h + lin2(x)
    h = h - lin1(z)
    h = h + lin1(x)
    return h


if __name__ == "__main__":
    key = jax.random.PRNGKey(0)
    kx, kz, kw1, kb1, kw2, kb2 = jax.random.split(key, 6)

    N = 200                                    # small batch; module input (N, 2)
    x = jax.random.normal(kx, (N, 2), dtype=jnp.float32)
    z = jax.random.normal(kz, (N, 2), dtype=jnp.float32)

    # PyTorch Linear parameter shapes: W [out, in], b [out].
    bound = 1.0 / (2.0 ** 0.5)
    w1 = jax.random.uniform(kw1, (2, 2), jnp.float32, -bound, bound)
    b1 = jax.random.uniform(kb1, (2,), jnp.float32, -bound, bound)
    w2 = jax.random.uniform(kw2, (2, 2), jnp.float32, -bound, bound)
    b2 = jax.random.uniform(kb2, (2,), jnp.float32, -bound, bound)

    out = fused_forward(x, z, w1, b1, w2, b2)
    jax.block_until_ready(out)

    ref = reference_forward(x, z, w1, b1, w2, b2)
    assert out.shape == (N, 2)
    assert jnp.allclose(out, ref, atol=1e-5, rtol=1e-5), "mismatch vs reference"

    print("KERNEL_OK")
</pallas_src>

<mosaic_0001>
module attributes {stable_mosaic.version = 11 : i64} {
  func.func @_fused_kernel(%arg0: i32, %arg1: memref<8x128xf32, #tpu.memory_space<vmem>>, %arg2: memref<4x128xf32, #tpu.memory_space<vmem>>, %arg3: memref<4x128xf32, #tpu.memory_space<vmem>>, %arg4: memref<4x128xf32, #tpu.memory_space<vmem>>) attributes {dimension_semantics = [#tpu.dimension_semantics<parallel>], iteration_bounds = array<i64: 1>, scalar_prefetch = 0 : i64, scratch_operands = 0 : i64, tpu.core_type = #tpu.core_type<tc>, window_params = [{pipeline_mode = #tpu.pipeline_mode<synchronous>, transform_indices = @transform_0, window_bounds = array<i64: 8, 128>}, {transform_indices = @transform_1, window_bounds = array<i64: 4, 128>}, {transform_indices = @transform_2, window_bounds = array<i64: 4, 128>}, {transform_indices = @transform_3, window_bounds = array<i64: 4, 128>}]} {
    %c0 = arith.constant 0 : index
    %c0_0 = arith.constant 0 : index
    %0 = vector.load %arg2[%c0, %c0_0] : memref<4x128xf32, #tpu.memory_space<vmem>>, vector<4x128xf32>
    %c0_1 = arith.constant 0 : index
    %c0_2 = arith.constant 0 : index
    %1 = vector.load %arg3[%c0_1, %c0_2] : memref<4x128xf32, #tpu.memory_space<vmem>>, vector<4x128xf32>
    %c127_i32 = arith.constant 127 : i32
    %2 = tpu.dynamic_rotate %0 by %c127_i32 dim 1 : vector<4x128xf32>, i32 -> vector<4x128xf32>
    %c1_i32 = arith.constant 1 : i32
    %3 = tpu.dynamic_rotate %0 by %c1_i32 dim 1 : vector<4x128xf32>, i32 -> vector<4x128xf32>
    %c127_i32_3 = arith.constant 127 : i32
    %4 = tpu.dynamic_rotate %1 by %c127_i32_3 dim 1 : vector<4x128xf32>, i32 -> vector<4x128xf32>
    %c1_i32_4 = arith.constant 1 : i32
    %5 = tpu.dynamic_rotate %1 by %c1_i32_4 dim 1 : vector<4x128xf32>, i32 -> vector<4x128xf32>
    %c0_5 = arith.constant 0 : index
    %c0_6 = arith.constant 0 : index
    %6 = vector.load %arg1[%c0_5, %c0_6] : memref<8x128xf32, #tpu.memory_space<vmem>>, vector<1x128xf32>
    %7 = vector.broadcast %6 : vector<1x128xf32> to vector<4x128xf32>
    %8 = arith.mulf %7, %0 : vector<4x128xf32>
    %c1 = arith.constant 1 : index
    %c0_7 = arith.constant 0 : index
    %9 = vector.load %arg1[%c1, %c0_7] : memref<8x128xf32, #tpu.memory_space<vmem>>, vector<1x128xf32>
    %10 = vector.broadcast %9 : vector<1x128xf32> to vector<4x128xf32>
    %11 = arith.mulf %10, %2 : vector<4x128xf32>
    %12 = arith.addf %8, %11 : vector<4x128xf32>
    %c2 = arith.constant 2 : index
    %c0_8 = arith.constant 0 : index
    %13 = vector.load %arg1[%c2, %c0_8] : memref<8x128xf32, #tpu.memory_space<vmem>>, vector<1x128xf32>
    %14 = vector.broadcast %13 : vector<1x128xf32> to vector<4x128xf32>
    %15 = arith.mulf %14, %3 : vector<4x128xf32>
    %16 = arith.addf %12, %15 : vector<4x128xf32>
    %c3 = arith.constant 3 : index
    %c0_9 = arith.constant 0 : index
    %17 = vector.load %arg1[%c3, %c0_9] : memref<8x128xf32, #tpu.memory_space<vmem>>, vector<1x128xf32>
    %18 = vector.broadcast %17 : vector<1x128xf32> to vector<4x128xf32>
    %19 = arith.mulf %18, %1 : vector<4x128xf32>
    %20 = arith.addf %16, %19 : vector<4x128xf32>
    %c4 = arith.constant 4 : index
    %c0_10 = arith.constant 0 : index
    %21 = vector.load %arg1[%c4, %c0_10] : memref<8x128xf32, #tpu.memory_space<vmem>>, vector<1x128xf32>
    %22 = vector.broadcast %21 : vector<1x128xf32> to vector<4x128xf32>
    %23 = arith.mulf %22, %4 : vector<4x128xf32>
    %24 = arith.addf %20, %23 : vector<4x128xf32>
    %c5 = arith.constant 5 : index
    %c0_11 = arith.constant 0 : index
    %25 = vector.load %arg1[%c5, %c0_11] : memref<8x128xf32, #tpu.memory_space<vmem>>, vector<1x128xf32>
    %26 = vector.broadcast %25 : vector<1x128xf32> to vector<4x128xf32>
    %27 = arith.mulf %26, %5 : vector<4x128xf32>
    %28 = arith.addf %24, %27 : vector<4x128xf32>
    %c6 = arith.constant 6 : index
    %c0_12 = arith.constant 0 : index
    %29 = vector.load %arg1[%c6, %c0_12] : memref<8x128xf32, #tpu.memory_space<vmem>>, vector<1x128xf32>
    %30 = vector.broadcast %29 : vector<1x128xf32> to vector<4x128xf32>
    %31 = arith.addf %28, %30 : vector<4x128xf32>
    %c0_13 = arith.constant 0 : index
    %c0_14 = arith.constant 0 : index
    %32 = vector.load %arg4[%c0_13, %c0_14] : memref<4x128xf32, #tpu.memory_space<vmem>>, vector<4x128xf32>
    tpu.vector_store %arg4[%c0_13, %c0_14], %31 {strides = array<i32>} : memref<4x128xf32, #tpu.memory_space<vmem>>, vector<4x128xf32>,
    return
  }
  func.func @transform_0(%arg0: i32) -> (i32, i32) {
    %c0_i32 = arith.constant 0 : i32
    %c0_i32_0 = arith.constant 0 : i32
    %c0_i32_1 = arith.constant 0 : i32
    return %c0_i32, %c0_i32_0 : i32, i32
  }
  func.func @transform_1(%arg0: i32) -> (i32, i32) {
    %c0_i32 = arith.constant 0 : i32
    %c0_i32_0 = arith.constant 0 : i32
    return %arg0, %c0_i32 : i32, i32
  }
  func.func @transform_2(%arg0: i32) -> (i32, i32) {
    %c0_i32 = arith.constant 0 : i32
    %c0_i32_0 = arith.constant 0 : i32
    return %arg0, %c0_i32 : i32, i32
  }
  func.func @transform_3(%arg0: i32) -> (i32, i32) {
    %c0_i32 = arith.constant 0 : i32
    %c0_i32_0 = arith.constant 0 : i32
    return %arg0, %c0_i32 : i32, i32
  }
}

</mosaic_0001>

<llo_original>
// kernel: tpu_custom_call.1
$region0: #{tpu_custom_call.1}
  #allocation0 [shape = 'u32[]', space=smem, size = 0x4, offset = 0x4, fixed_abs, tag = 'smem constant byte address 0x4 - core index']
  #allocation1 [shape = 'u32[72,128]{1,0:T(1,128)}', space=vmem, size = 0x9000, scoped, tag = 'internal scratch']
  %s0 = inlined_call_operand.hbm [shape: f32[8,128], index: 0, kind: input, shape index: {}]
  %s1 = inlined_call_operand.hbm [shape: f32[4,128], index: 1, kind: input, shape index: {}]
  %s2 = inlined_call_operand.hbm [shape: f32[4,128], index: 2, kind: input, shape index: {}]
  %s3 = inlined_call_operand.hbm [shape: f32[4,128], index: 3, kind: output, shape index: {}]
  %s4 = sld [smem:[#allocation0]]
  $region34: #{tpu_custom_call.1} parent=0
    _
  %s6 = ssub.s32 1, %s4
  %s7 = scalar_select 0, %s6, %s4
  $region1: #{tpu_custom_call.1} parent=0
    #allocation2 [shape = 'u8[4096]{0}', space=vmem, size = 0x1000, scoped, tag = 'input window, operand 0, single buffered']
    #allocation3 [shape = 's32[1]{0}', space=sflag, size = 0x4, scoped, tag = 'scoped memory for tpu_custom_call.1']
    #allocation4 [shape = 's32[1]{0}', space=sflag, size = 0x4, scoped, tag = 'scoped memory for tpu_custom_call.1']
    #allocation5 [shape = 'u8[2048]{0}', space=vmem, size = 0x800, scoped, tag = 'input window, operand 1, single buffered']
    #allocation6 [shape = 's32[1]{0}', space=sflag, size = 0x4, scoped, tag = 'scoped memory for tpu_custom_call.1']
    #allocation7 [shape = 'u8[2048]{0}', space=vmem, size = 0x800, scoped, tag = 'input window, operand 2, single buffered']
    #allocation8 [shape = 'u8[2048]{0}', space=vmem, size = 0x800, scoped, tag = 'output window, operand 0, single buffered']
    %8 = vsyncpa [#allocation3], 0
    %9 = vsyncpa [#allocation6], 0
    %10 = vsyncpa [#allocation4], 0
    // Predicated region
    $region2: #{tpu_custom_call.1} parent=1 // pred_check
      _
    $region3: #{tpu_custom_call.1} parent=1 // pred_check_branch
      %12 = sbr.rel (0) target = $region5
    $region4: #{tpu_custom_call.1} parent=1 // pred_region
      %14 = vsyncadd [#allocation3], 0
      %s16 = sshll.u32 %s0, 4
      %s17 = int_to_ptr.hbm [resolvable:$true] %s16
      %s18 = sshll.u32 [#allocation2], 4
      %s19 = int_to_ptr.vmem [resolvable:$true] %s18
      %21 = dma.hbm_to_vmem [thread:$0]  %s17, 128, %s19, [#allocation3]
    $region5: #{tpu_custom_call.1} parent=1 // pred_fallthru
      _
    // Predicated region
    $region6: #{tpu_custom_call.1} parent=1 // pred_check
      _
    $region7: #{tpu_custom_call.1} parent=1 // pred_check_branch
      %23 = sbr.rel (0) target = $region9
    $region8: #{tpu_custom_call.1} parent=1 // pred_region
      %25 = vsyncadd [#allocation6], 0
      %s27 = sshll.u32 %s1, 4
      %s28 = int_to_ptr.hbm [resolvable:$true] %s27
      %s29 = sshll.u32 [#allocation5], 4
      %s30 = int_to_ptr.vmem [resolvable:$true] %s29
      %32 = dma.hbm_to_vmem [thread:$0]  %s28, 64, %s30, [#allocation6]
    $region9: #{tpu_custom_call.1} parent=1 // pred_fallthru
      _
    // Predicated region
    $region10: #{tpu_custom_call.1} parent=1 // pred_check
      _
    $region11: #{tpu_custom_call.1} parent=1 // pred_check_branch
      %34 = sbr.rel (0) target = $region13
    $region12: #{tpu_custom_call.1} parent=1 // pred_region
      %36 = vsyncadd [#allocation6], 0
      %s38 = sshll.u32 %s2, 4
      %s39 = int_to_ptr.hbm [resolvable:$true] %s38
      %s40 = sshll.u32 [#allocation7], 4
      %s41 = int_to_ptr.vmem [resolvable:$true] %s40
      %43 = dma.hbm_to_vmem [thread:$0]  %s39, 64, %s41, [#allocation6]
    $region13: #{tpu_custom_call.1} parent=1 // pred_fallthru
      _
    // Predicated region
    $region14: #{tpu_custom_call.1} parent=1 // pred_check
      _
    $region15: #{tpu_custom_call.1} parent=1 // pred_check_branch
      %45 = sbr.rel (0) target = $region17
    $region16: #{tpu_custom_call.1} parent=1 // pred_region
      %47 = dma.done [#allocation3], 128
    $region17: #{tpu_custom_call.1} parent=1 // pred_fallthru
      _
    // Predicated region
    $region18: #{tpu_custom_call.1} parent=1 // pred_check
      _
    $region19: #{tpu_custom_call.1} parent=1 // pred_check_branch
      %49 = sbr.rel (0) target = $region21
    $region20: #{tpu_custom_call.1} parent=1 // pred_region
      %51 = dma.done [#allocation6], 64
    $region21: #{tpu_custom_call.1} parent=1 // pred_fallthru
      _
    // Predicated region
    $region22: #{tpu_custom_call.1} parent=1 // pred_check
      _
    $region23: #{tpu_custom_call.1} parent=1 // pred_check_branch
      %53 = sbr.rel (0) target = $region25
    $region24: #{tpu_custom_call.1} parent=1 // pred_region
      %55 = dma.done [#allocation6], 64
    $region25: #{tpu_custom_call.1} parent=1 // pred_fallthru
      _
    %v56 = vld [vmem:[#allocation5] sm:$0xf]
    %v57 = vld [vmem:[#allocation7] sm:$0xf]
    %58 = vrot.lane.b32.xlu0 %v56, 127
    %v59 = vpop.permute.xlu0 %58
    %60 = vrot.lane.b32.xlu0 %v56, 1
    %v61 = vpop.permute.xlu0 %60
    %62 = vrot.lane.b32.xlu0 %v57, 127
    %v63 = vpop.permute.xlu0 %62
    %64 = vrot.lane.b32.xlu0 %v57, 1
    %v65 = vpop.permute.xlu0 %64
    %v66 = vld [vmem:[#allocation2] sm:$0x1]
    %v67 = vperm.slane %v66, 0
    %v68 = vmul.f32 %v67, %v56
    %v69 = vld [vmem:[#allocation2 + $0x1] sm:$0x1]
    %v70 = vperm.slane %v69, 0
    %v71 = vmul.f32 %v70, %v59
    %v72 = vadd.f32 %v68, %v71
    %v73 = vld [vmem:[#allocation2 + $0x2] sm:$0x1]
    %v74 = vperm.slane %v73, 0
    %v75 = vmul.f32 %v74, %v61
    %v76 = vadd.f32 %v72, %v75
    %v77 = vld [vmem:[#allocation2 + $0x3] sm:$0x1]
    %v78 = vperm.slane %v77, 0
    %v79 = vmul.f32 %v78, %v57
    %v80 = vadd.f32 %v76, %v79
    %v81 = vld [vmem:[#allocation2 + $0x4] sm:$0x1]
    %v82 = vperm.slane %v81, 0
    %v83 = vmul.f32 %v82, %v63
    %v84 = vadd.f32 %v80, %v83
    %v85 = vld [vmem:[#allocation2 + $0x5] sm:$0x1]
    %v86 = vperm.slane %v85, 0
    %v87 = vmul.f32 %v86, %v65
    %v88 = vadd.f32 %v84, %v87
    %v89 = vld [vmem:[#allocation2 + $0x6] sm:$0x1]
    %v90 = vperm.slane %v89, 0
    %v91 = vadd.f32 %v88, %v90
    %92 = vst [vmem:[#allocation8] sm:$0xf] %v91
    // Predicated region
    $region26: #{tpu_custom_call.1} parent=1 // pred_check
      _
    $region27: #{tpu_custom_call.1} parent=1 // pred_check_branch
      %94 = sbr.rel (0) target = $region29
    $region28: #{tpu_custom_call.1} parent=1 // pred_region
      %96 = vsyncadd [#allocation4], 0
      %s98 = sshll.u32 [#allocation8], 4
      %s99 = int_to_ptr.vmem [resolvable:$true] %s98
      %s100 = sshll.u32 %s3, 4
      %s101 = int_to_ptr.hbm [resolvable:$true] %s100
      %103 = dma.vmem_to_hbm [thread:$0]  %s99, 64, %s101, [#allocation4]
    $region29: #{tpu_custom_call.1} parent=1 // pred_fallthru
      _
    // Predicated region
    $region30: #{tpu_custom_call.1} parent=1 // pred_check
      _
    $region31: #{tpu_custom_call.1} parent=1 // pred_check_branch
      %105 = sbr.rel (0) target = $region33
    $region32: #{tpu_custom_call.1} parent=1 // pred_region
      %107 = dma.done [#allocation4], 64
    $region33: #{tpu_custom_call.1} parent=1 // pred_fallthru
      _
    %108 = vsyncpa [#allocation3], 1
    %109 = vsyncpa [#allocation6], 1
    %110 = vsyncpa [#allocation4], 1

</llo_original>
